<compile_context>
chip_gen: v6e
topology: v6e:2x2x1
jax: 0.10.0
libtpu: 0.0.40
codegen_flags: <defaults>
</compile_context>

<pallas_src>
import functools

import jax
import jax.numpy as jnp
from jax import lax
from jax.experimental import pallas as pl
from jax.experimental.pallas import tpu as pltpu

# ---- deterministic problem parameters (stand-in for params_dict) ----------
ETA_C = 0.95     # charge efficiency
ETA_D = 0.95     # discharge efficiency
P_MAX = 1.0      # max (dis)charge power per step
SOC_MAX = 4.0    # energy capacity
SOC_MIN = 0.0
SOC0 = 2.0       # initial state of charge
MU = 0.1         # quadratic smoothing term ("mu" in opti_problem_mu)
RHO = 10.0       # SoC-constraint penalty weight
LR = 0.05        # projected-gradient step size
N_ITERS = 200    # fixed iteration count (replaces ECOS/SCS convergence loop)
UNROLL = 4       # manual unroll of the PGD loop (re-sweep 2/4/8 if layout changes)
assert N_ITERS % UNROLL == 0

# ---- constants folded out of the 200-iteration serial chain ----------------
# State is kept pre-scaled: a = d / eta_d, b = eta_c * c, so net = b - a is a
# single subtract per iteration (saves 2 vmuls/iter on the saturating VALU).
INV_ETA_D = 1.0 / ETA_D
INV_ETA_C = 1.0 / ETA_C
DECAY = 1.0 - 2.0 * MU * LR          # (1 - 2*mu*lr) multiplies the state each step
LXA = LR * INV_ETA_D                 # price-step coefficient in the a-update
LXB = -LR * ETA_C                    # price-step coefficient in the b-update
CA = LR * RHO * INV_ETA_D * INV_ETA_D
CB = LR * RHO * ETA_C * ETA_C
A_MAX = P_MAX * INV_ETA_D            # box bounds in pre-scaled coordinates
B_MAX = P_MAX * ETA_C
HI = SOC_MAX - SOC0                  # SoC bounds re-centered around SOC0
LO = SOC_MIN - SOC0


# -----------------------------------------------------------------------------
# PGD kernel: one grid step = one block of lane-packed batch rows, fully
# resident in VMEM / vregs.  The SoC prefix sum and its adjoint (suffix sum)
# are ceil(log2(T)) roll+add steps (XLU + VPU only, no MXU, no HBM matrices).
# -----------------------------------------------------------------------------
def _make_kernel(T_seg, L):
    """T_seg = real horizon (segment size along lanes), L = padded lane width."""

    def kernel(x_ref, out_ref):
        x = x_ref[...]                       # [TB, L] lane-packed price forecasts
        lxa = LXA * x                        # hoisted price-gradient steps
        lxb = LXB * x

        # Segment-local Hillis-Steele scan masks, hoisted out of the PGD loop
        # (float masks -> plain vmul+vadd, no per-step constant broadcasts).
        col = lax.broadcasted_iota(jnp.int32, x.shape, 1)
        p = col % T_seg if T_seg != L else col
        pre, suf = [], []
        k = 1
        while k < T_seg:
            pre.append(((p >= k).astype(jnp.float32), k))
            suf.append(((p < T_seg - k).astype(jnp.float32), L - k))
            k *= 2

        def prefix_sum(v):                   # out[:, t] = sum_{s <= t, same seg}
            for m, s in pre:
                v = v + m * pltpu.roll(v, s, axis=1)
            return v

        def suffix_sum(v):                   # out[:, t] = sum_{s >= t, same seg}
            for m, s in suf:
                v = v + m * pltpu.roll(v, s, axis=1)
            return v

        def step(carry):
            a, b = carry                     # a = d/eta_d, b = eta_c*c
            soc = prefix_sum(b - a)          # SoC trajectory (rel. SOC0)
            g = soc - jnp.clip(soc, LO, HI)  # SoC-bound violation
            r = suffix_sum(g)                # adjoint (reverse cumsum)
            a = jnp.clip(DECAY * a + lxa + CA * r, 0.0, A_MAX)
            b = jnp.clip(DECAY * b + lxb - CB * r, 0.0, B_MAX)
            return a, b

        def body(_, carry):
            for _ in range(UNROLL):          # manual unroll: larger sched window
                carry = step(carry)
            return carry

        z = jnp.zeros_like(x)
        a, b = lax.fori_loop(0, N_ITERS // UNROLL, body, (z, z))
        out_ref[...] = ETA_D * a - INV_ETA_C * b     # net dispatch d - c

    return kernel


# -----------------------------------------------------------------------------
# Blocking / packing helpers
# -----------------------------------------------------------------------------
def _pick_block(rows):
    """Packed-sublane block size.

    Keep the loop working set (~8 live [TB,128] f32 arrays + scan masks) near
    the 64-vreg file (TB<=32), and give the grid >= 2 blocks whenever there
    are enough rows so dimension_semantics=('parallel',) can shard across
    v7x's two TensorCores (no effect on v5e/v6e).
    """
    if rows <= 8:
        return rows, rows                    # single block == full array
    TB = 32
    while TB > 8 and rows <= TB:             # ensure >= 2 grid blocks
        TB //= 2
    rows_pad = -(-rows // TB) * TB
    return TB, rows_pad


@functools.lru_cache(maxsize=None)
def _build_forward(B, T):
    """Build (once per (B, T)) a jitted forward with a cached pallas_call."""
    # Lane packing: pack 128//T horizon-segments per 128-lane row when T<128;
    # otherwise one segment per row padded up to a multiple of 128 lanes.
    n_pack = max(128 // T, 1) if T <= 128 else 1
    seg = n_pack * T                         # lanes holding real data per row
    L = -(-seg // 128) * 128                 # lane width (multiple of 128)
    rows = -(-B // n_pack)                   # packed rows needed
    TB, rows_pad = _pick_block(rows)
    B_pad = rows_pad * n_pack
    grid = (rows_pad // TB,)

    n_scan = max((T - 1).bit_length(), 0)
    cost = pl.CostEstimate(
        flops=int(N_ITERS * rows_pad * L * (4 * n_scan + 14)),
        transcendentals=0,
        bytes_accessed=int(2 * rows_pad * L * 4),
    )

    call = pl.pallas_call(
        _make_kernel(T, L),
        out_shape=jax.ShapeDtypeStruct((rows_pad, L), jnp.float32),
        grid=grid,
        in_specs=[pl.BlockSpec((TB, L), lambda i: (i, 0))],
        out_specs=pl.BlockSpec((TB, L), lambda i: (i, 0)),
        compiler_params=pltpu.CompilerParams(
            dimension_semantics=("parallel",)),   # batch grid -> both v7x TCs
        cost_estimate=cost,
    )

    def fwd(x):
        # Zero-padded rows / lanes solve a zero-price problem -> zero dispatch,
        # and the segment-local scan masks keep them out of the real segments.
        xp = jnp.pad(x, ((0, B_pad - B), (0, 0)))
        xp = xp.reshape(rows_pad, seg)              # lane-pack T-segments
        if seg < L:
            xp = jnp.pad(xp, ((0, 0), (0, L - seg)))
        y = call(xp)
        return y[:, :seg].reshape(B_pad, T)[:B]

    return jax.jit(fwd)


def opti_layer_forward(x):
    """JAX/Pallas equivalent of OptiLayer.forward."""
    if isinstance(x, list):                  # mirrors `if isinstance(x, list)`
        x = x[0]
    x = jnp.asarray(x, jnp.float32)
    B, T = x.shape
    return _build_forward(int(B), int(T))(x)


if __name__ == "__main__":
    key = jax.random.PRNGKey(0)
    B, T = 8, 32
    # synthetic imbalance-price forecasts
    x = jax.random.normal(key, (B, T), dtype=jnp.float32) * 50.0

    out = jax.block_until_ready(opti_layer_forward(x))

    assert out.shape == (B, T)
    assert out.dtype == jnp.float32
    assert bool(jnp.all(jnp.isfinite(out)))
    # dispatch must respect the power box constraints
    assert bool(jnp.all(out <= P_MAX + 1e-5)) and bool(jnp.all(out >= -P_MAX - 1e-5))
    print("KERNEL_OK")
</pallas_src>

<mosaic_0001>
module attributes {stable_mosaic.version = 11 : i64} {
  func.func @kernel(%arg0: i32, %arg1: memref<2x128xf32, #tpu.memory_space<vmem>>, %arg2: memref<2x128xf32, #tpu.memory_space<vmem>>) attributes {dimension_semantics = [#tpu.dimension_semantics<parallel>], iteration_bounds = array<i64: 1>, scalar_prefetch = 0 : i64, scratch_operands = 0 : i64, tpu.core_type = #tpu.core_type<tc>, window_params = [{transform_indices = @transform_0, window_bounds = array<i64: 2, 128>}, {transform_indices = @transform_1, window_bounds = array<i64: 2, 128>}]} {
    %c0 = arith.constant 0 : index
    %c0_0 = arith.constant 0 : index
    %0 = vector.load %arg1[%c0, %c0_0] : memref<2x128xf32, #tpu.memory_space<vmem>>, vector<2x128xf32>
    %cst = arith.constant 0.0526315793 : f32
    %1 = vector.broadcast %cst : f32 to vector<2x128xf32>
    %2 = arith.mulf %1, %0 : vector<2x128xf32>
    %cst_1 = arith.constant -4.750000e-02 : f32
    %3 = vector.broadcast %cst_1 : f32 to vector<2x128xf32>
    %4 = arith.mulf %3, %0 : vector<2x128xf32>
    %5 = tpu.iota {dimensions = array<i32: 1>} : vector<2x128xi32>
    %c32_i32 = arith.constant 32 : i32
    %c0_i32 = arith.constant 0 : i32
    %6 = arith.cmpi eq, %c32_i32, %c0_i32 : i32
    %c1_i32 = arith.constant 1 : i32
    %7 = arith.select %6, %c1_i32, %c32_i32 : i32
    %8 = vector.broadcast %7 : i32 to vector<2x128xi32>
    %9 = arith.remsi %5, %8 : vector<2x128xi32>
    %c0_i32_2 = arith.constant 0 : i32
    %10 = vector.broadcast %c0_i32_2 : i32 to vector<2x128xi32>
    %11 = arith.cmpi ne, %9, %10 : vector<2x128xi32>
    %c0_i32_3 = arith.constant 0 : i32
    %12 = vector.broadcast %c0_i32_3 : i32 to vector<2x128xi32>
    %13 = arith.cmpi slt, %9, %12 : vector<2x128xi32>
    %c0_i32_4 = arith.constant 0 : i32
    %14 = arith.cmpi slt, %7, %c0_i32_4 : i32
    %15 = vector.broadcast %14 : i1 to vector<2x128xi1>
    %16 = vector.broadcast %15 : vector<2x128xi1> to vector<2x128xi1>
    %17 = arith.xori %13, %16 : vector<2x128xi1>
    %18 = arith.andi %17, %11 : vector<2x128xi1>
    %19 = vector.broadcast %7 : i32 to vector<2x128xi32>
    %20 = arith.addi %9, %19 : vector<2x128xi32>
    %21 = arith.select %18, %20, %9 : vector<2x128xi1>, vector<2x128xi32>
    %c1_i32_5 = arith.constant 1 : i32
    %22 = vector.broadcast %c1_i32_5 : i32 to vector<2x128xi32>
    %23 = arith.cmpi sge, %21, %22 : vector<2x128xi32>
    %24 = arith.extui %23 : vector<2x128xi1> to vector<2x128xi32>
    %25 = arith.sitofp %24 : vector<2x128xi32> to vector<2x128xf32>
    %c31_i32 = arith.constant 31 : i32
    %26 = vector.broadcast %c31_i32 : i32 to vector<2x128xi32>
    %27 = arith.cmpi slt, %21, %26 : vector<2x128xi32>
    %28 = arith.extui %27 : vector<2x128xi1> to vector<2x128xi32>
    %29 = arith.sitofp %28 : vector<2x128xi32> to vector<2x128xf32>
    %c2_i32 = arith.constant 2 : i32
    %30 = vector.broadcast %c2_i32 : i32 to vector<2x128xi32>
    %31 = arith.cmpi sge, %21, %30 : vector<2x128xi32>
    %32 = arith.extui %31 : vector<2x128xi1> to vector<2x128xi32>
    %33 = arith.sitofp %32 : vector<2x128xi32> to vector<2x128xf32>
    %c30_i32 = arith.constant 30 : i32
    %34 = vector.broadcast %c30_i32 : i32 to vector<2x128xi32>
    %35 = arith.cmpi slt, %21, %34 : vector<2x128xi32>
    %36 = arith.extui %35 : vector<2x128xi1> to vector<2x128xi32>
    %37 = arith.sitofp %36 : vector<2x128xi32> to vector<2x128xf32>
    %c4_i32 = arith.constant 4 : i32
    %38 = vector.broadcast %c4_i32 : i32 to vector<2x128xi32>
    %39 = arith.cmpi sge, %21, %38 : vector<2x128xi32>
    %40 = arith.extui %39 : vector<2x128xi1> to vector<2x128xi32>
    %41 = arith.sitofp %40 : vector<2x128xi32> to vector<2x128xf32>
    %c28_i32 = arith.constant 28 : i32
    %42 = vector.broadcast %c28_i32 : i32 to vector<2x128xi32>
    %43 = arith.cmpi slt, %21, %42 : vector<2x128xi32>
    %44 = arith.extui %43 : vector<2x128xi1> to vector<2x128xi32>
    %45 = arith.sitofp %44 : vector<2x128xi32> to vector<2x128xf32>
    %c8_i32 = arith.constant 8 : i32
    %46 = vector.broadcast %c8_i32 : i32 to vector<2x128xi32>
    %47 = arith.cmpi sge, %21, %46 : vector<2x128xi32>
    %48 = arith.extui %47 : vector<2x128xi1> to vector<2x128xi32>
    %49 = arith.sitofp %48 : vector<2x128xi32> to vector<2x128xf32>
    %c24_i32 = arith.constant 24 : i32
    %50 = vector.broadcast %c24_i32 : i32 to vector<2x128xi32>
    %51 = arith.cmpi slt, %21, %50 : vector<2x128xi32>
    %52 = arith.extui %51 : vector<2x128xi1> to vector<2x128xi32>
    %53 = arith.sitofp %52 : vector<2x128xi32> to vector<2x128xf32>
    %c16_i32 = arith.constant 16 : i32
    %54 = vector.broadcast %c16_i32 : i32 to vector<2x128xi32>
    %55 = arith.cmpi sge, %21, %54 : vector<2x128xi32>
    %56 = arith.extui %55 : vector<2x128xi1> to vector<2x128xi32>
    %57 = arith.sitofp %56 : vector<2x128xi32> to vector<2x128xf32>
    %c16_i32_6 = arith.constant 16 : i32
    %58 = vector.broadcast %c16_i32_6 : i32 to vector<2x128xi32>
    %59 = arith.cmpi slt, %21, %58 : vector<2x128xi32>
    %60 = arith.extui %59 : vector<2x128xi1> to vector<2x128xi32>
    %61 = arith.sitofp %60 : vector<2x128xi32> to vector<2x128xf32>
    %cst_7 = arith.constant 0.000000e+00 : f32
    %62 = vector.broadcast %cst_7 : f32 to vector<2x128xf32>
    %c0_i32_8 = arith.constant 0 : i32
    %c50_i32 = arith.constant 50 : i32
    %63 = arith.addi %c0_i32_8, %c50_i32 : i32
    %c1_i32_9 = arith.constant 1 : i32
    %64:2 = scf.for %arg3 = %c0_i32_8 to %63 step %c1_i32_9 iter_args(%arg4 = %62, %arg5 = %62) -> (vector<2x128xf32>, vector<2x128xf32>)  : i32 {
      %71 = arith.subf %arg5, %arg4 : vector<2x128xf32>
      %c1_i32_14 = arith.constant 1 : i32
      %72 = tpu.dynamic_rotate %71 by %c1_i32_14 dim 1 : vector<2x128xf32>, i32 -> vector<2x128xf32>
      %73 = arith.mulf %25, %72 : vector<2x128xf32>
      %74 = arith.addf %71, %73 : vector<2x128xf32>
      %c2_i32_15 = arith.constant 2 : i32
      %75 = tpu.dynamic_rotate %74 by %c2_i32_15 dim 1 : vector<2x128xf32>, i32 -> vector<2x128xf32>
      %76 = arith.mulf %33, %75 : vector<2x128xf32>
      %77 = arith.addf %74, %76 : vector<2x128xf32>
      %c4_i32_16 = arith.constant 4 : i32
      %78 = tpu.dynamic_rotate %77 by %c4_i32_16 dim 1 : vector<2x128xf32>, i32 -> vector<2x128xf32>
      %79 = arith.mulf %41, %78 : vector<2x128xf32>
      %80 = arith.addf %77, %79 : vector<2x128xf32>
      %c8_i32_17 = arith.constant 8 : i32
      %81 = tpu.dynamic_rotate %80 by %c8_i32_17 dim 1 : vector<2x128xf32>, i32 -> vector<2x128xf32>
      %82 = arith.mulf %49, %81 : vector<2x128xf32>
      %83 = arith.addf %80, %82 : vector<2x128xf32>
      %c16_i32_18 = arith.constant 16 : i32
      %84 = tpu.dynamic_rotate %83 by %c16_i32_18 dim 1 : vector<2x128xf32>, i32 -> vector<2x128xf32>
      %85 = arith.mulf %57, %84 : vector<2x128xf32>
      %86 = arith.addf %83, %85 : vector<2x128xf32>
      %cst_19 = arith.constant -2.000000e+00 : f32
      %cst_20 = arith.constant 2.000000e+00 : f32
      %87 = vector.broadcast %cst_19 : f32 to vector<2x128xf32>
      %88 = arith.maximumf %87, %86 : vector<2x128xf32>
      %89 = vector.broadcast %cst_20 : f32 to vector<2x128xf32>
      %90 = arith.minimumf %89, %88 : vector<2x128xf32>
      %91 = arith.subf %86, %90 : vector<2x128xf32>
      %c127_i32 = arith.constant 127 : i32
      %92 = tpu.dynamic_rotate %91 by %c127_i32 dim 1 : vector<2x128xf32>, i32 -> vector<2x128xf32>
      %93 = arith.mulf %29, %92 : vector<2x128xf32>
      %94 = arith.addf %91, %93 : vector<2x128xf32>
      %c126_i32 = arith.constant 126 : i32
      %95 = tpu.dynamic_rotate %94 by %c126_i32 dim 1 : vector<2x128xf32>, i32 -> vector<2x128xf32>
      %96 = arith.mulf %37, %95 : vector<2x128xf32>
      %97 = arith.addf %94, %96 : vector<2x128xf32>
      %c124_i32 = arith.constant 124 : i32
      %98 = tpu.dynamic_rotate %97 by %c124_i32 dim 1 : vector<2x128xf32>, i32 -> vector<2x128xf32>
      %99 = arith.mulf %45, %98 : vector<2x128xf32>
      %100 = arith.addf %97, %99 : vector<2x128xf32>
      %c120_i32 = arith.constant 120 : i32
      %101 = tpu.dynamic_rotate %100 by %c120_i32 dim 1 : vector<2x128xf32>, i32 -> vector<2x128xf32>
      %102 = arith.mulf %53, %101 : vector<2x128xf32>
      %103 = arith.addf %100, %102 : vector<2x128xf32>
      %c112_i32 = arith.constant 112 : i32
      %104 = tpu.dynamic_rotate %103 by %c112_i32 dim 1 : vector<2x128xf32>, i32 -> vector<2x128xf32>
      %105 = arith.mulf %61, %104 : vector<2x128xf32>
      %106 = arith.addf %103, %105 : vector<2x128xf32>
      %cst_21 = arith.constant 9.900000e-01 : f32
      %107 = vector.broadcast %cst_21 : f32 to vector<2x128xf32>
      %108 = arith.mulf %107, %arg4 : vector<2x128xf32>
      %109 = arith.addf %108, %2 : vector<2x128xf32>
      %cst_22 = arith.constant 0.55401665 : f32
      %110 = vector.broadcast %cst_22 : f32 to vector<2x128xf32>
      %111 = arith.mulf %110, %106 : vector<2x128xf32>
      %112 = arith.addf %109, %111 : vector<2x128xf32>
      %cst_23 = arith.constant 0.000000e+00 : f32
      %cst_24 = arith.constant 1.05263162 : f32
      %113 = vector.broadcast %cst_23 : f32 to vector<2x128xf32>
      %114 = arith.maximumf %113, %112 : vector<2x128xf32>
      %115 = vector.broadcast %cst_24 : f32 to vector<2x128xf32>
      %116 = arith.minimumf %115, %114 : vector<2x128xf32>
      %cst_25 = arith.constant 9.900000e-01 : f32
      %117 = vector.broadcast %cst_25 : f32 to vector<2x128xf32>
      %118 = arith.mulf %117, %arg5 : vector<2x128xf32>
      %119 = arith.addf %118, %4 : vector<2x128xf32>
      %cst_26 = arith.constant 4.512500e-01 : f32
      %120 = vector.broadcast %cst_26 : f32 to vector<2x128xf32>
      %121 = arith.mulf %120, %106 : vector<2x128xf32>
      %122 = arith.subf %119, %121 : vector<2x128xf32>
      %cst_27 = arith.constant 0.000000e+00 : f32
      %cst_28 = arith.constant 0.949999988 : f32
      %123 = vector.broadcast %cst_27 : f32 to vector<2x128xf32>
      %124 = arith.maximumf %123, %122 : vector<2x128xf32>
      %125 = vector.broadcast %cst_28 : f32 to vector<2x128xf32>
      %126 = arith.minimumf %125, %124 : vector<2x128xf32>
      %127 = arith.subf %126, %116 : vector<2x128xf32>
      %c1_i32_29 = arith.constant 1 : i32
      %128 = tpu.dynamic_rotate %127 by %c1_i32_29 dim 1 : vector<2x128xf32>, i32 -> vector<2x128xf32>
      %129 = arith.mulf %25, %128 : vector<2x128xf32>
      %130 = arith.addf %127, %129 : vector<2x128xf32>
      %c2_i32_30 = arith.constant 2 : i32
      %131 = tpu.dynamic_rotate %130 by %c2_i32_30 dim 1 : vector<2x128xf32>, i32 -> vector<2x128xf32>
      %132 = arith.mulf %33, %131 : vector<2x128xf32>
      %133 = arith.addf %130, %132 : vector<2x128xf32>
      %c4_i32_31 = arith.constant 4 : i32
      %134 = tpu.dynamic_rotate %133 by %c4_i32_31 dim 1 : vector<2x128xf32>, i32 -> vector<2x128xf32>
      %135 = arith.mulf %41, %134 : vector<2x128xf32>
      %136 = arith.addf %133, %135 : vector<2x128xf32>
      %c8_i32_32 = arith.constant 8 : i32
      %137 = tpu.dynamic_rotate %136 by %c8_i32_32 dim 1 : vector<2x128xf32>, i32 -> vector<2x128xf32>
      %138 = arith.mulf %49, %137 : vector<2x128xf32>
      %139 = arith.addf %136, %138 : vector<2x128xf32>
      %c16_i32_33 = arith.constant 16 : i32
      %140 = tpu.dynamic_rotate %139 by %c16_i32_33 dim 1 : vector<2x128xf32>, i32 -> vector<2x128xf32>
      %141 = arith.mulf %57, %140 : vector<2x128xf32>
      %142 = arith.addf %139, %141 : vector<2x128xf32>
      %cst_34 = arith.constant -2.000000e+00 : f32
      %cst_35 = arith.constant 2.000000e+00 : f32
      %143 = vector.broadcast %cst_34 : f32 to vector<2x128xf32>
      %144 = arith.maximumf %143, %142 : vector<2x128xf32>
      %145 = vector.broadcast %cst_35 : f32 to vector<2x128xf32>
      %146 = arith.minimumf %145, %144 : vector<2x128xf32>
      %147 = arith.subf %142, %146 : vector<2x128xf32>
      %c127_i32_36 = arith.constant 127 : i32
      %148 = tpu.dynamic_rotate %147 by %c127_i32_36 dim 1 : vector<2x128xf32>, i32 -> vector<2x128xf32>
      %149 = arith.mulf %29, %148 : vector<2x128xf32>
      %150 = arith.addf %147, %149 : vector<2x128xf32>
      %c126_i32_37 = arith.constant 126 : i32
      %151 = tpu.dynamic_rotate %150 by %c126_i32_37 dim 1 : vector<2x128xf32>, i32 -> vector<2x128xf32>
      %152 = arith.mulf %37, %151 : vector<2x128xf32>
      %153 = arith.addf %150, %152 : vector<2x128xf32>
      %c124_i32_38 = arith.constant 124 : i32
      %154 = tpu.dynamic_rotate %153 by %c124_i32_38 dim 1 : vector<2x128xf32>, i32 -> vector<2x128xf32>
      %155 = arith.mulf %45, %154 : vector<2x128xf32>
      %156 = arith.addf %153, %155 : vector<2x128xf32>
      %c120_i32_39 = arith.constant 120 : i32
      %157 = tpu.dynamic_rotate %156 by %c120_i32_39 dim 1 : vector<2x128xf32>, i32 -> vector<2x128xf32>
      %158 = arith.mulf %53, %157 : vector<2x128xf32>
      %159 = arith.addf %156, %158 : vector<2x128xf32>
      %c112_i32_40 = arith.constant 112 : i32
      %160 = tpu.dynamic_rotate %159 by %c112_i32_40 dim 1 : vector<2x128xf32>, i32 -> vector<2x128xf32>
      %161 = arith.mulf %61, %160 : vector<2x128xf32>
      %162 = arith.addf %159, %161 : vector<2x128xf32>
      %cst_41 = arith.constant 9.900000e-01 : f32
      %163 = vector.broadcast %cst_41 : f32 to vector<2x128xf32>
      %164 = arith.mulf %163, %116 : vector<2x128xf32>
      %165 = arith.addf %164, %2 : vector<2x128xf32>
      %cst_42 = arith.constant 0.55401665 : f32
      %166 = vector.broadcast %cst_42 : f32 to vector<2x128xf32>
      %167 = arith.mulf %166, %162 : vector<2x128xf32>
      %168 = arith.addf %165, %167 : vector<2x128xf32>
      %cst_43 = arith.constant 0.000000e+00 : f32
      %cst_44 = arith.constant 1.05263162 : f32
      %169 = vector.broadcast %cst_43 : f32 to vector<2x128xf32>
      %170 = arith.maximumf %169, %168 : vector<2x128xf32>
      %171 = vector.broadcast %cst_44 : f32 to vector<2x128xf32>
      %172 = arith.minimumf %171, %170 : vector<2x128xf32>
      %cst_45 = arith.constant 9.900000e-01 : f32
      %173 = vector.broadcast %cst_45 : f32 to vector<2x128xf32>
      %174 = arith.mulf %173, %126 : vector<2x128xf32>
      %175 = arith.addf %174, %4 : vector<2x128xf32>
      %cst_46 = arith.constant 4.512500e-01 : f32
      %176 = vector.broadcast %cst_46 : f32 to vector<2x128xf32>
      %177 = arith.mulf %176, %162 : vector<2x128xf32>
      %178 = arith.subf %175, %177 : vector<2x128xf32>
      %cst_47 = arith.constant 0.000000e+00 : f32
      %cst_48 = arith.constant 0.949999988 : f32
      %179 = vector.broadcast %cst_47 : f32 to vector<2x128xf32>
      %180 = arith.maximumf %179, %178 : vector<2x128xf32>
      %181 = vector.broadcast %cst_48 : f32 to vector<2x128xf32>
      %182 = arith.minimumf %181, %180 : vector<2x128xf32>
      %183 = arith.subf %182, %172 : vector<2x128xf32>
      %c1_i32_49 = arith.constant 1 : i32
      %184 = tpu.dynamic_rotate %183 by %c1_i32_49 dim 1 : vector<2x128xf32>, i32 -> vector<2x128xf32>
      %185 = arith.mulf %25, %184 : vector<2x128xf32>
      %186 = arith.addf %183, %185 : vector<2x128xf32>
      %c2_i32_50 = arith.constant 2 : i32
      %187 = tpu.dynamic_rotate %186 by %c2_i32_50 dim 1 : vector<2x128xf32>, i32 -> vector<2x128xf32>
      %188 = arith.mulf %33, %187 : vector<2x128xf32>
      %189 = arith.addf %186, %188 : vector<2x128xf32>
      %c4_i32_51 = arith.constant 4 : i32
      %190 = tpu.dynamic_rotate %189 by %c4_i32_51 dim 1 : vector<2x128xf32>, i32 -> vector<2x128xf32>
      %191 = arith.mulf %41, %190 : vector<2x128xf32>
      %192 = arith.addf %189, %191 : vector<2x128xf32>
      %c8_i32_52 = arith.constant 8 : i32
      %193 = tpu.dynamic_rotate %192 by %c8_i32_52 dim 1 : vector<2x128xf32>, i32 -> vector<2x128xf32>
      %194 = arith.mulf %49, %193 : vector<2x128xf32>
      %195 = arith.addf %192, %194 : vector<2x128xf32>
      %c16_i32_53 = arith.constant 16 : i32
      %196 = tpu.dynamic_rotate %195 by %c16_i32_53 dim 1 : vector<2x128xf32>, i32 -> vector<2x128xf32>
      %197 = arith.mulf %57, %196 : vector<2x128xf32>
      %198 = arith.addf %195, %197 : vector<2x128xf32>
      %cst_54 = arith.constant -2.000000e+00 : f32
      %cst_55 = arith.constant 2.000000e+00 : f32
      %199 = vector.broadcast %cst_54 : f32 to vector<2x128xf32>
      %200 = arith.maximumf %199, %198 : vector<2x128xf32>
      %201 = vector.broadcast %cst_55 : f32 to vector<2x128xf32>
      %202 = arith.minimumf %201, %200 : vector<2x128xf32>
      %203 = arith.subf %198, %202 : vector<2x128xf32>
      %c127_i32_56 = arith.constant 127 : i32
      %204 = tpu.dynamic_rotate %203 by %c127_i32_56 dim 1 : vector<2x128xf32>, i32 -> vector<2x128xf32>
      %205 = arith.mulf %29, %204 : vector<2x128xf32>
      %206 = arith.addf %203, %205 : vector<2x128xf32>
      %c126_i32_57 = arith.constant 126 : i32
      %207 = tpu.dynamic_rotate %206 by %c126_i32_57 dim 1 : vector<2x128xf32>, i32 -> vector<2x128xf32>
      %208 = arith.mulf %37, %207 : vector<2x128xf32>
      %209 = arith.addf %206, %208 : vector<2x128xf32>
      %c124_i32_58 = arith.constant 124 : i32
      %210 = tpu.dynamic_rotate %209 by %c124_i32_58 dim 1 : vector<2x128xf32>, i32 -> vector<2x128xf32>
      %211 = arith.mulf %45, %210 : vector<2x128xf32>
      %212 = arith.addf %209, %211 : vector<2x128xf32>
      %c120_i32_59 = arith.constant 120 : i32
      %213 = tpu.dynamic_rotate %212 by %c120_i32_59 dim 1 : vector<2x128xf32>, i32 -> vector<2x128xf32>
      %214 = arith.mulf %53, %213 : vector<2x128xf32>
      %215 = arith.addf %212, %214 : vector<2x128xf32>
      %c112_i32_60 = arith.constant 112 : i32
      %216 = tpu.dynamic_rotate %215 by %c112_i32_60 dim 1 : vector<2x128xf32>, i32 -> vector<2x128xf32>
      %217 = arith.mulf %61, %216 : vector<2x128xf32>
      %218 = arith.addf %215, %217 : vector<2x128xf32>
      %cst_61 = arith.constant 9.900000e-01 : f32
      %219 = vector.broadcast %cst_61 : f32 to vector<2x128xf32>
      %220 = arith.mulf %219, %172 : vector<2x128xf32>
      %221 = arith.addf %220, %2 : vector<2x128xf32>
      %cst_62 = arith.constant 0.55401665 : f32
      %222 = vector.broadcast %cst_62 : f32 to vector<2x128xf32>
      %223 = arith.mulf %222, %218 : vector<2x128xf32>
      %224 = arith.addf %221, %223 : vector<2x128xf32>
      %cst_63 = arith.constant 0.000000e+00 : f32
      %cst_64 = arith.constant 1.05263162 : f32
      %225 = vector.broadcast %cst_63 : f32 to vector<2x128xf32>
      %226 = arith.maximumf %225, %224 : vector<2x128xf32>
      %227 = vector.broadcast %cst_64 : f32 to vector<2x128xf32>
      %228 = arith.minimumf %227, %226 : vector<2x128xf32>
      %cst_65 = arith.constant 9.900000e-01 : f32
      %229 = vector.broadcast %cst_65 : f32 to vector<2x128xf32>
      %230 = arith.mulf %229, %182 : vector<2x128xf32>
      %231 = arith.addf %230, %4 : vector<2x128xf32>
      %cst_66 = arith.constant 4.512500e-01 : f32
      %232 = vector.broadcast %cst_66 : f32 to vector<2x128xf32>
      %233 = arith.mulf %232, %218 : vector<2x128xf32>
      %234 = arith.subf %231, %233 : vector<2x128xf32>
      %cst_67 = arith.constant 0.000000e+00 : f32
      %cst_68 = arith.constant 0.949999988 : f32
      %235 = vector.broadcast %cst_67 : f32 to vector<2x128xf32>
      %236 = arith.maximumf %235, %234 : vector<2x128xf32>
      %237 = vector.broadcast %cst_68 : f32 to vector<2x128xf32>
      %238 = arith.minimumf %237, %236 : vector<2x128xf32>
      %239 = arith.subf %238, %228 : vector<2x128xf32>
      %c1_i32_69 = arith.constant 1 : i32
      %240 = tpu.dynamic_rotate %239 by %c1_i32_69 dim 1 : vector<2x128xf32>, i32 -> vector<2x128xf32>
      %241 = arith.mulf %25, %240 : vector<2x128xf32>
      %242 = arith.addf %239, %241 : vector<2x128xf32>
      %c2_i32_70 = arith.constant 2 : i32
      %243 = tpu.dynamic_rotate %242 by %c2_i32_70 dim 1 : vector<2x128xf32>, i32 -> vector<2x128xf32>
      %244 = arith.mulf %33, %243 : vector<2x128xf32>
      %245 = arith.addf %242, %244 : vector<2x128xf32>
      %c4_i32_71 = arith.constant 4 : i32
      %246 = tpu.dynamic_rotate %245 by %c4_i32_71 dim 1 : vector<2x128xf32>, i32 -> vector<2x128xf32>
      %247 = arith.mulf %41, %246 : vector<2x128xf32>
      %248 = arith.addf %245, %247 : vector<2x128xf32>
      %c8_i32_72 = arith.constant 8 : i32
      %249 = tpu.dynamic_rotate %248 by %c8_i32_72 dim 1 : vector<2x128xf32>, i32 -> vector<2x128xf32>
      %250 = arith.mulf %49, %249 : vector<2x128xf32>
      %251 = arith.addf %248, %250 : vector<2x128xf32>
      %c16_i32_73 = arith.constant 16 : i32
      %252 = tpu.dynamic_rotate %251 by %c16_i32_73 dim 1 : vector<2x128xf32>, i32 -> vector<2x128xf32>
      %253 = arith.mulf %57, %252 : vector<2x128xf32>
      %254 = arith.addf %251, %253 : vector<2x128xf32>
      %cst_74 = arith.constant -2.000000e+00 : f32
      %cst_75 = arith.constant 2.000000e+00 : f32
      %255 = vector.broadcast %cst_74 : f32 to vector<2x128xf32>
      %256 = arith.maximumf %255, %254 : vector<2x128xf32>
      %257 = vector.broadcast %cst_75 : f32 to vector<2x128xf32>
      %258 = arith.minimumf %257, %256 : vector<2x128xf32>
      %259 = arith.subf %254, %258 : vector<2x128xf32>
      %c127_i32_76 = arith.constant 127 : i32
      %260 = tpu.dynamic_rotate %259 by %c127_i32_76 dim 1 : vector<2x128xf32>, i32 -> vector<2x128xf32>
      %261 = arith.mulf %29, %260 : vector<2x128xf32>
      %262 = arith.addf %259, %261 : vector<2x128xf32>
      %c126_i32_77 = arith.constant 126 : i32
      %263 = tpu.dynamic_rotate %262 by %c126_i32_77 dim 1 : vector<2x128xf32>, i32 -> vector<2x128xf32>
      %264 = arith.mulf %37, %263 : vector<2x128xf32>
      %265 = arith.addf %262, %264 : vector<2x128xf32>
      %c124_i32_78 = arith.constant 124 : i32
      %266 = tpu.dynamic_rotate %265 by %c124_i32_78 dim 1 : vector<2x128xf32>, i32 -> vector<2x128xf32>
      %267 = arith.mulf %45, %266 : vector<2x128xf32>
      %268 = arith.addf %265, %267 : vector<2x128xf32>
      %c120_i32_79 = arith.constant 120 : i32
      %269 = tpu.dynamic_rotate %268 by %c120_i32_79 dim 1 : vector<2x128xf32>, i32 -> vector<2x128xf32>
      %270 = arith.mulf %53, %269 : vector<2x128xf32>
      %271 = arith.addf %268, %270 : vector<2x128xf32>
      %c112_i32_80 = arith.constant 112 : i32
      %272 = tpu.dynamic_rotate %271 by %c112_i32_80 dim 1 : vector<2x128xf32>, i32 -> vector<2x128xf32>
      %273 = arith.mulf %61, %272 : vector<2x128xf32>
      %274 = arith.addf %271, %273 : vector<2x128xf32>
      %cst_81 = arith.constant 9.900000e-01 : f32
      %275 = vector.broadcast %cst_81 : f32 to vector<2x128xf32>
      %276 = arith.mulf %275, %228 : vector<2x128xf32>
      %277 = arith.addf %276, %2 : vector<2x128xf32>
      %cst_82 = arith.constant 0.55401665 : f32
      %278 = vector.broadcast %cst_82 : f32 to vector<2x128xf32>
      %279 = arith.mulf %278, %274 : vector<2x128xf32>
      %280 = arith.addf %277, %279 : vector<2x128xf32>
      %cst_83 = arith.constant 0.000000e+00 : f32
      %cst_84 = arith.constant 1.05263162 : f32
      %281 = vector.broadcast %cst_83 : f32 to vector<2x128xf32>
      %282 = arith.maximumf %281, %280 : vector<2x128xf32>
      %283 = vector.broadcast %cst_84 : f32 to vector<2x128xf32>
      %284 = arith.minimumf %283, %282 : vector<2x128xf32>
      %cst_85 = arith.constant 9.900000e-01 : f32
      %285 = vector.broadcast %cst_85 : f32 to vector<2x128xf32>
      %286 = arith.mulf %285, %238 : vector<2x128xf32>
      %287 = arith.addf %286, %4 : vector<2x128xf32>
      %cst_86 = arith.constant 4.512500e-01 : f32
      %288 = vector.broadcast %cst_86 : f32 to vector<2x128xf32>
      %289 = arith.mulf %288, %274 : vector<2x128xf32>
      %290 = arith.subf %287, %289 : vector<2x128xf32>
      %cst_87 = arith.constant 0.000000e+00 : f32
      %cst_88 = arith.constant 0.949999988 : f32
      %291 = vector.broadcast %cst_87 : f32 to vector<2x128xf32>
      %292 = arith.maximumf %291, %290 : vector<2x128xf32>
      %293 = vector.broadcast %cst_88 : f32 to vector<2x128xf32>
      %294 = arith.minimumf %293, %292 : vector<2x128xf32>
      scf.yield %284, %294 : vector<2x128xf32>, vector<2x128xf32>
    }
    %cst_10 = arith.constant 0.949999988 : f32
    %65 = vector.broadcast %cst_10 : f32 to vector<2x128xf32>
    %66 = arith.mulf %65, %64#0 : vector<2x128xf32>
    %cst_11 = arith.constant 1.05263162 : f32
    %67 = vector.broadcast %cst_11 : f32 to vector<2x128xf32>
    %68 = arith.mulf %67, %64#1 : vector<2x128xf32>
    %69 = arith.subf %66, %68 : vector<2x128xf32>
    %c0_12 = arith.constant 0 : index
    %c0_13 = arith.constant 0 : index
    %70 = vector.load %arg2[%c0_12, %c0_13] : memref<2x128xf32, #tpu.memory_space<vmem>>, vector<2x128xf32>
    tpu.vector_store %arg2[%c0_12, %c0_13], %69 {strides = array<i32>} : memref<2x128xf32, #tpu.memory_space<vmem>>, vector<2x128xf32>,
    return
  }
  func.func @transform_0(%arg0: i32) -> (i32, i32) {
    %c0_i32 = arith.constant 0 : i32
    %c0_i32_0 = arith.constant 0 : i32
    return %arg0, %c0_i32 : i32, i32
  }
  func.func @transform_1(%arg0: i32) -> (i32, i32) {
    %c0_i32 = arith.constant 0 : i32
    %c0_i32_0 = arith.constant 0 : i32
    return %arg0, %c0_i32 : i32, i32
  }
}

</mosaic_0001>

<llo_original>
// kernel: fwd.1
$region0: #{fwd.1}
  #allocation0 [shape = 'u32[]', space=smem, size = 0x4, offset = 0x4, fixed_abs, tag = 'smem constant byte address 0x4 - core index']
  #allocation1 [shape = 'u32[144,128]{1,0:T(1,128)}', space=vmem, size = 0x12000, scoped, tag = 'internal scratch']
  %s0 = inlined_call_operand.vmem [shape: f32[2,128], index: 0, kind: input, shape index: {}]
  %s1 = inlined_call_operand.vmem [shape: f32[2,128], index: 1, kind: output, shape index: {}]
  %s2 = sld [smem:[#allocation0]]
  $region21: #{fwd.1} parent=0
    _
  %s4 = ssub.s32 1, %s2
  %s5 = scalar_select 0, %s4, %s2
  // Predicated region
  $region2: #{fwd.1} parent=0 // pred_check
    _
  $region3: #{fwd.1} parent=0 // pred_check_branch
    %7 = sbr.rel (0) target = $region5
  $region4: #{fwd.1} parent=0 // pred_region
    _
  $region5: #{fwd.1} parent=0 // pred_fallthru
    _
  %v8 = vld [vmem:[%s0] sm:$0x3]
  %v9 = vmul.f32 %v8, 0.05263158
  %v10 = vmul.f32 %v8, -0.0475
  %v11 = vlaneseq
  %v12 = vand.u32 %v11, 127
  %vm13 = vcmp.lt.s32.totalorder %v12, 0
  %v14 = vsub.s32 0, %v12
  %v15 = vsel %vm13, %v14, %v12
  %v16 = vshrl.u32 %v15, 5
  %v17 = vand.u32 %v15, 31
  %v18 = vsub.s32 0, %v17
  %v19 = vsel %vm13, %v18, %v17
  %vm20 = vcmp.ne.s32.totalorder %v19, 0
  %vm21 = vcmp.lt.s32.totalorder %v19, 0
  %vm22 = vmand %vm21, %vm20
  %v23 = vadd.s32 %v19, 32
  %v24 = vsel %vm22, %v23, %v19
  %vm25 = vcmp.ge.s32.totalorder %v24, 1
  %v26 = vsel %vm25, 1, 0
  %v27 = vcvt.s32.f32 %v26
  %vm28 = vcmp.lt.s32.totalorder %v24, 31
  %v29 = vsel %vm28, 1, 0
  %v30 = vcvt.s32.f32 %v29
  %vm31 = vcmp.ge.s32.totalorder %v24, 2
  %v32 = vsel %vm31, 1, 0
  %v33 = vcvt.s32.f32 %v32
  %vm34 = vcmp.lt.s32.totalorder %v24, 30
  %v35 = vsel %vm34, 1, 0
  %v36 = vcvt.s32.f32 %v35
  %vm37 = vcmp.ge.s32.totalorder %v24, 4
  %v38 = vsel %vm37, 1, 0
  %v39 = vcvt.s32.f32 %v38
  %vm40 = vcmp.lt.s32.totalorder %v24, 28
  %v41 = vsel %vm40, 1, 0
  %v42 = vcvt.s32.f32 %v41
  %vm43 = vcmp.ge.s32.totalorder %v24, 8
  %v44 = vsel %vm43, 1, 0
  %v45 = vcvt.s32.f32 %v44
  %vm46 = vcmp.lt.s32.totalorder %v24, 24
  %v47 = vsel %vm46, 1, 0
  %v48 = vcvt.s32.f32 %v47
  %vm49 = vcmp.ge.s32.totalorder %v24, 16
  %v50 = vsel %vm49, 1, 0
  %v51 = vcvt.s32.f32 %v50
  %vm52 = vcmp.lt.s32.totalorder %v24, 16
  %v53 = vsel %vm52, 1, 0
  %v54 = vcvt.s32.f32 %v53
  loop: start=0, step=1, limit=50
  $region6: #{fwd.1} parent=0 // loop_pre_header
    _
  $region7: #{fwd.1} parent=0 // loop_header
    %s56 = sphi 0, %s60
    %p57 = scmp.ge.s32.totalorder %s56, 50
    %v61 = vphi 0.0, %v280
    %v62 = vphi 0.0, %v286
  $region8: #{fwd.1} parent=0 // loop_header_branch
    %59 = sbr.rel (%p57) target = $region12
  $region9: #{fwd.1} parent=0 // loop_body
    %v63 = vsub.f32 %v62, %v61
    %64 = vrot.lane.b32.xlu0 %v63, 1
    %v65 = vpop.permute.xlu0 %64
    %v66 = vmul.f32 %v27, %v65
    %v67 = vadd.f32 %v63, %v66
    %68 = vrot.lane.b32.xlu0 %v67, 2
    %v69 = vpop.permute.xlu0 %68
    %v70 = vmul.f32 %v33, %v69
    %v71 = vadd.f32 %v67, %v70
    %72 = vrot.lane.b32.xlu0 %v71, 4
    %v73 = vpop.permute.xlu0 %72
    %v74 = vmul.f32 %v39, %v73
    %v75 = vadd.f32 %v71, %v74
    %76 = vrot.lane.b32.xlu0 %v75, 8
    %v77 = vpop.permute.xlu0 %76
    %v78 = vmul.f32 %v45, %v77
    %v79 = vadd.f32 %v75, %v78
    %80 = vrot.lane.b32.xlu0 %v79, 16
    %v81 = vpop.permute.xlu0 %80
    %v82 = vmul.f32 %v51, %v81
    %v83 = vadd.f32 %v79, %v82
    %v84 = vmax.f32 %v83, -2.0
    %v85 = vmin.f32 %v84, 2.0
    %v86 = vsub.f32 %v83, %v85
    %87 = vrot.lane.b32.xlu0 %v86, 127
    %v88 = vpop.permute.xlu0 %87
    %v89 = vmul.f32 %v30, %v88
    %v90 = vadd.f32 %v86, %v89
    %91 = vrot.lane.b32.xlu0 %v90, 126
    %v92 = vpop.permute.xlu0 %91
    %v93 = vmul.f32 %v36, %v92
    %v94 = vadd.f32 %v90, %v93
    %95 = vrot.lane.b32.xlu0 %v94, 124
    %v96 = vpop.permute.xlu0 %95
    %v97 = vmul.f32 %v42, %v96
    %v98 = vadd.f32 %v94, %v97
    %99 = vrot.lane.b32.xlu0 %v98, 120
    %v100 = vpop.permute.xlu0 %99
    %v101 = vmul.f32 %v48, %v100
    %v102 = vadd.f32 %v98, %v101
    %103 = vrot.lane.b32.xlu0 %v102, 112
    %v104 = vpop.permute.xlu0 %103
    %v105 = vmul.f32 %v54, %v104
    %v106 = vadd.f32 %v102, %v105
    %v107 = vmul.f32 %v61, 0.99
    %v108 = vadd.f32 %v107, %v9
    %v109 = vmul.f32 %v106, 0.55401665
    %v110 = vadd.f32 %v108, %v109
    %v111 = vmax.f32 %v110, 0.0
    %v112 = vmin.f32 %v111, 1.0526316
    %v113 = vmul.f32 %v62, 0.99
    %v114 = vadd.f32 %v113, %v10
    %v115 = vmul.f32 %v106, 0.45125
    %v116 = vsub.f32 %v114, %v115
    %v117 = vmax.f32 %v116, 0.0
    %v118 = vmin.f32 %v117, 0.95
    %v119 = vsub.f32 %v118, %v112
    %120 = vrot.lane.b32.xlu0 %v119, 1
    %v121 = vpop.permute.xlu0 %120
    %v122 = vmul.f32 %v27, %v121
    %v123 = vadd.f32 %v119, %v122
    %124 = vrot.lane.b32.xlu0 %v123, 2
    %v125 = vpop.permute.xlu0 %124
    %v126 = vmul.f32 %v33, %v125
    %v127 = vadd.f32 %v123, %v126
    %128 = vrot.lane.b32.xlu0 %v127, 4
    %v129 = vpop.permute.xlu0 %128
    %v130 = vmul.f32 %v39, %v129
    %v131 = vadd.f32 %v127, %v130
    %132 = vrot.lane.b32.xlu0 %v131, 8
    %v133 = vpop.permute.xlu0 %132
    %v134 = vmul.f32 %v45, %v133
    %v135 = vadd.f32 %v131, %v134
    %136 = vrot.lane.b32.xlu0 %v135, 16
    %v137 = vpop.permute.xlu0 %136
    %v138 = vmul.f32 %v51, %v137
    %v139 = vadd.f32 %v135, %v138
    %v140 = vmax.f32 %v139, -2.0
    %v141 = vmin.f32 %v140, 2.0
    %v142 = vsub.f32 %v139, %v141
    %143 = vrot.lane.b32.xlu0 %v142, 127
    %v144 = vpop.permute.xlu0 %143
    %v145 = vmul.f32 %v30, %v144
    %v146 = vadd.f32 %v142, %v145
    %147 = vrot.lane.b32.xlu0 %v146, 126
    %v148 = vpop.permute.xlu0 %147
    %v149 = vmul.f32 %v36, %v148
    %v150 = vadd.f32 %v146, %v149
    %151 = vrot.lane.b32.xlu0 %v150, 124
    %v152 = vpop.permute.xlu0 %151
    %v153 = vmul.f32 %v42, %v152
    %v154 = vadd.f32 %v150, %v153
    %155 = vrot.lane.b32.xlu0 %v154, 120
    %v156 = vpop.permute.xlu0 %155
    %v157 = vmul.f32 %v48, %v156
    %v158 = vadd.f32 %v154, %v157
    %159 = vrot.lane.b32.xlu0 %v158, 112
    %v160 = vpop.permute.xlu0 %159
    %v161 = vmul.f32 %v54, %v160
    %v162 = vadd.f32 %v158, %v161
    %v163 = vmul.f32 %v112, 0.99
    %v164 = vadd.f32 %v163, %v9
    %v165 = vmul.f32 %v162, 0.55401665
    %v166 = vadd.f32 %v164, %v165
    %v167 = vmax.f32 %v166, 0.0
    %v168 = vmin.f32 %v167, 1.0526316
    %v169 = vmul.f32 %v118, 0.99
    %v170 = vadd.f32 %v169, %v10
    %v171 = vmul.f32 %v162, 0.45125
    %v172 = vsub.f32 %v170, %v171
    %v173 = vmax.f32 %v172, 0.0
    %v174 = vmin.f32 %v173, 0.95
    %v175 = vsub.f32 %v174, %v168
    %176 = vrot.lane.b32.xlu0 %v175, 1
    %v177 = vpop.permute.xlu0 %176
    %v178 = vmul.f32 %v27, %v177
    %v179 = vadd.f32 %v175, %v178
    %180 = vrot.lane.b32.xlu0 %v179, 2
    %v181 = vpop.permute.xlu0 %180
    %v182 = vmul.f32 %v33, %v181
    %v183 = vadd.f32 %v179, %v182
    %184 = vrot.lane.b32.xlu0 %v183, 4
    %v185 = vpop.permute.xlu0 %184
    %v186 = vmul.f32 %v39, %v185
    %v187 = vadd.f32 %v183, %v186
    %188 = vrot.lane.b32.xlu0 %v187, 8
    %v189 = vpop.permute.xlu0 %188
    %v190 = vmul.f32 %v45, %v189
    %v191 = vadd.f32 %v187, %v190
    %192 = vrot.lane.b32.xlu0 %v191, 16
    %v193 = vpop.permute.xlu0 %192
    %v194 = vmul.f32 %v51, %v193
    %v195 = vadd.f32 %v191, %v194
    %v196 = vmax.f32 %v195, -2.0
    %v197 = vmin.f32 %v196, 2.0
    %v198 = vsub.f32 %v195, %v197
    %199 = vrot.lane.b32.xlu0 %v198, 127
    %v200 = vpop.permute.xlu0 %199
    %v201 = vmul.f32 %v30, %v200
    %v202 = vadd.f32 %v198, %v201
    %203 = vrot.lane.b32.xlu0 %v202, 126
    %v204 = vpop.permute.xlu0 %203
    %v205 = vmul.f32 %v36, %v204
    %v206 = vadd.f32 %v202, %v205
    %207 = vrot.lane.b32.xlu0 %v206, 124
    %v208 = vpop.permute.xlu0 %207
    %v209 = vmul.f32 %v42, %v208
    %v210 = vadd.f32 %v206, %v209
    %211 = vrot.lane.b32.xlu0 %v210, 120
    %v212 = vpop.permute.xlu0 %211
    %v213 = vmul.f32 %v48, %v212
    %v214 = vadd.f32 %v210, %v213
    %215 = vrot.lane.b32.xlu0 %v214, 112
    %v216 = vpop.permute.xlu0 %215
    %v217 = vmul.f32 %v54, %v216
    %v218 = vadd.f32 %v214, %v217
    %v219 = vmul.f32 %v168, 0.99
    %v220 = vadd.f32 %v219, %v9
    %v221 = vmul.f32 %v218, 0.55401665
    %v222 = vadd.f32 %v220, %v221
    %v223 = vmax.f32 %v222, 0.0
    %v224 = vmin.f32 %v223, 1.0526316
    %v225 = vmul.f32 %v174, 0.99
    %v226 = vadd.f32 %v225, %v10
    %v227 = vmul.f32 %v218, 0.45125
    %v228 = vsub.f32 %v226, %v227
    %v229 = vmax.f32 %v228, 0.0
    %v230 = vmin.f32 %v229, 0.95
    %v231 = vsub.f32 %v230, %v224
    %232 = vrot.lane.b32.xlu0 %v231, 1
    %v233 = vpop.permute.xlu0 %232
    %v234 = vmul.f32 %v27, %v233
    %v235 = vadd.f32 %v231, %v234
    %236 = vrot.lane.b32.xlu0 %v235, 2
    %v237 = vpop.permute.xlu0 %236
    %v238 = vmul.f32 %v33, %v237
    %v239 = vadd.f32 %v235, %v238
    %240 = vrot.lane.b32.xlu0 %v239, 4
    %v241 = vpop.permute.xlu0 %240
    %v242 = vmul.f32 %v39, %v241
    %v243 = vadd.f32 %v239, %v242
    %244 = vrot.lane.b32.xlu0 %v243, 8
    %v245 = vpop.permute.xlu0 %244
    %v246 = vmul.f32 %v45, %v245
    %v247 = vadd.f32 %v243, %v246
    %248 = vrot.lane.b32.xlu0 %v247, 16
    %v249 = vpop.permute.xlu0 %248
    %v250 = vmul.f32 %v51, %v249
    %v251 = vadd.f32 %v247, %v250
    %v252 = vmax.f32 %v251, -2.0
    %v253 = vmin.f32 %v252, 2.0
    %v254 = vsub.f32 %v251, %v253
    %255 = vrot.lane.b32.xlu0 %v254, 127
    %v256 = vpop.permute.xlu0 %255
    %v257 = vmul.f32 %v30, %v256
    %v258 = vadd.f32 %v254, %v257
    %259 = vrot.lane.b32.xlu0 %v258, 126
    %v260 = vpop.permute.xlu0 %259
    %v261 = vmul.f32 %v36, %v260
    %v262 = vadd.f32 %v258, %v261
    %263 = vrot.lane.b32.xlu0 %v262, 124
    %v264 = vpop.permute.xlu0 %263
    %v265 = vmul.f32 %v42, %v264
    %v266 = vadd.f32 %v262, %v265
    %267 = vrot.lane.b32.xlu0 %v266, 120
    %v268 = vpop.permute.xlu0 %267
    %v269 = vmul.f32 %v48, %v268
    %v270 = vadd.f32 %v266, %v269
    %271 = vrot.lane.b32.xlu0 %v270, 112
    %v272 = vpop.permute.xlu0 %271
    %v273 = vmul.f32 %v54, %v272
    %v274 = vadd.f32 %v270, %v273
    %v275 = vmul.f32 %v224, 0.99
    %v276 = vadd.f32 %v275, %v9
    %v277 = vmul.f32 %v274, 0.55401665
    %v278 = vadd.f32 %v276, %v277
    %v279 = vmax.f32 %v278, 0.0
    %v280 = vmin.f32 %v279, 1.0526316
    %v281 = vmul.f32 %v230, 0.99
    %v282 = vadd.f32 %v281, %v10
    %v283 = vmul.f32 %v274, 0.45125
    %v284 = vsub.f32 %v282, %v283
    %v285 = vmax.f32 %v284, 0.0
    %v286 = vmin.f32 %v285, 0.95
  $region10: #{fwd.1} parent=0 // loop_footer
    %s60 = sadd.s32 1, %s56
  $region11: #{fwd.1} parent=0 // loop_footer_branch
    %55 = sbr.rel target = $region7
  $region12: #{fwd.1} parent=0 // loop_exit
    _
  %v287 = vmul.f32 %v61, 0.95
  %v288 = vmul.f32 %v62, 1.0526316
  %v289 = vsub.f32 %v287, %v288
  %290 = vst [vmem:[%s1] sm:$0x3] %v289
  // Predicated region
  $region13: #{fwd.1} parent=0 // pred_check
    _
  $region14: #{fwd.1} parent=0 // pred_check_branch
    %292 = sbr.rel (0) target = $region16
  $region15: #{fwd.1} parent=0 // pred_region
    _
  $region16: #{fwd.1} parent=0 // pred_fallthru
    _
  // Predicated region
  $region17: #{fwd.1} parent=0 // pred_check
    _
  $region18: #{fwd.1} parent=0 // pred_check_branch
    %294 = sbr.rel (0) target = $region20
  $region19: #{fwd.1} parent=0 // pred_region
    _
  $region20: #{fwd.1} parent=0 // pred_fallthru
    _

</llo_original>
